<compile_context>
chip_gen: v7x
topology: tpu7x:2x2x1
jax: 0.10.0
libtpu: 0.0.40
codegen_flags: <defaults>
</compile_context>

<pallas_src>
import functools
import math

import jax
import jax.numpy as jnp
from jax import lax
from jax.experimental import pallas as pl
from jax.experimental.pallas import tpu as pltpu


# ------------------------------ tiling helpers --------------------------------
_TARGET_TILE_BYTES = 2 << 20   # ~2 MiB input tile  => >=4 MiB HBM traffic / step
_VMEM_BUDGET_BYTES = 24 << 20  # keep (2 in + 2 out + f32 scratch) under this


def _sublane_multiple(itemsize):
    # f32 -> 8, bf16 -> 16, int8/fp8 -> 32 (sub-32-bit dtypes pack along sublanes)
    return 8 * max(1, 4 // itemsize)


def _pick_block_rows(rows, d, itemsize):
    """Row-tile size: byte-budgeted, VMEM-capped, dtype-aware sublane multiple."""
    sub = _sublane_multiple(itemsize)
    # Byte budget per input tile.
    br_bytes = max(1, _TARGET_TILE_BYTES // (d * itemsize))
    # VMEM cap: 2 in + 2 out double-buffers (itemsize) + ~2 f32 intermediates/row.
    per_row_vmem = d * (4 * itemsize + 8)
    br_vmem = max(1, _VMEM_BUDGET_BYTES // per_row_vmem)
    br = min(br_bytes, br_vmem)
    br = max(sub, (br // sub) * sub)
    if br >= rows:
        return rows            # single full-extent tile (no divisibility constraint)
    return br


def _vmem_limit_bytes(br, d, itemsize):
    tile = br * d * itemsize
    need = 4 * tile + 2 * br * d * 4 + 8 * d * 4 + (1 << 20)
    return int(min(max(need, 16 << 20), 48 << 20))


# --------------------------------- kernels ------------------------------------
def _rmsnorm_kernel(x_ref, w_ref, o_ref, *, eps):
    """Wide path: d >= 128, full feature axis per block."""
    x = x_ref[...].astype(jnp.float32)                    # (br, d)
    ms = jnp.mean(x * x, axis=-1, keepdims=True)          # (br, 1)
    inv = lax.rsqrt(ms + eps)                             # EUP rsqrt
    w = w_ref[...].astype(jnp.float32)                    # (1, d)
    o_ref[...] = (x * inv * w).astype(o_ref.dtype)


def _rmsnorm_packed_kernel(x_ref, w_ref, seg_ref, o_ref, *, eps, d):
    """Packed narrow path: k=128/d rows packed per 128-lane row.

    seg_ref is a (128,128) block-diagonal ones matrix; xsq @ seg broadcasts each
    d-wide segment's sum of squares to every lane of that segment (MXU reduce),
    keeping the store lane-dense.
    """
    x = x_ref[...].astype(jnp.float32)                    # (br, 128)
    xsq = x * x
    seg_sum = jnp.dot(xsq, seg_ref[...],
                      preferred_element_type=jnp.float32,
                      precision=lax.Precision.HIGHEST)    # (br, 128)
    inv = lax.rsqrt(seg_sum * (1.0 / d) + eps)
    w = w_ref[...].astype(jnp.float32)                    # (1, 128) = weight tiled k times
    o_ref[...] = (x * inv * w).astype(o_ref.dtype)


# -------------------------------- wrappers -------------------------------------
def _rms_norm_wide(x2, weight, eps):
    rows, d = x2.shape
    itemsize = x2.dtype.itemsize
    br = _pick_block_rows(rows, d, itemsize)
    grid = (pl.cdiv(rows, br),)
    return pl.pallas_call(
        functools.partial(_rmsnorm_kernel, eps=eps),
        out_shape=jax.ShapeDtypeStruct((rows, d), x2.dtype),
        grid=grid,
        in_specs=[
            pl.BlockSpec((br, d), lambda i: (i, 0)),       # x tile (rows tiled)
            pl.BlockSpec((1, d), lambda i: (0, 0)),        # weight (resident)
        ],
        out_specs=pl.BlockSpec((br, d), lambda i: (i, 0)),
        compiler_params=pltpu.CompilerParams(
            dimension_semantics=("parallel",),
            vmem_limit_bytes=_vmem_limit_bytes(br, d, itemsize),
        ),
    )(x2, weight.reshape(1, d))


def _rms_norm_packed(x2, weight, eps):
    rows, d = x2.shape
    k = 128 // d
    pad = (-rows) % k
    if pad:
        x2 = jnp.concatenate([x2, jnp.zeros((pad, d), x2.dtype)], axis=0)
    prows = (rows + pad) // k
    xp = x2.reshape(prows, 128)                            # pack k rows per lane-row
    wp = jnp.tile(weight, k).reshape(1, 128)
    idx = jnp.arange(128, dtype=jnp.int32)
    seg = (idx[:, None] // d == idx[None, :] // d).astype(jnp.float32)  # block-diag ones

    itemsize = xp.dtype.itemsize
    br = _pick_block_rows(prows, 128, itemsize)
    grid = (pl.cdiv(prows, br),)
    out = pl.pallas_call(
        functools.partial(_rmsnorm_packed_kernel, eps=eps, d=d),
        out_shape=jax.ShapeDtypeStruct((prows, 128), x2.dtype),
        grid=grid,
        in_specs=[
            pl.BlockSpec((br, 128), lambda i: (i, 0)),     # packed x tile
            pl.BlockSpec((1, 128), lambda i: (0, 0)),      # packed weight (resident)
            pl.BlockSpec((128, 128), lambda i: (0, 0)),    # segment matrix (resident)
        ],
        out_specs=pl.BlockSpec((br, 128), lambda i: (i, 0)),
        compiler_params=pltpu.CompilerParams(
            dimension_semantics=("parallel",),
            vmem_limit_bytes=_vmem_limit_bytes(br, 128, itemsize),
        ),
    )(xp, wp, seg)
    out = out.reshape(prows * k, d)
    return out[:rows] if pad else out


def rms_norm(x, weight, eps=1e-5):
    """x: (..., d_model); weight: (d_model,). Returns same shape/dtype as x."""
    orig_shape = x.shape
    d = orig_shape[-1]
    rows = math.prod(orig_shape[:-1]) if len(orig_shape) > 1 else 1
    x2 = x.reshape(rows, d)
    if d >= 128:
        out = _rms_norm_wide(x2, weight, eps)
    elif 128 % d == 0:
        out = _rms_norm_packed(x2, weight, eps)
    else:
        # TODO(synk): narrow d that does not divide 128 — plain XLA fallback.
        out = rms_norm_reference(x2, weight, eps)
    return out.reshape(orig_shape)


# --------------------------- pure-JAX reference --------------------------------
def rms_norm_reference(x, weight, eps=1e-5):
    xf = x.astype(jnp.float32)
    ms = jnp.mean(xf * xf, axis=-1, keepdims=True)
    return (xf * lax.rsqrt(ms + eps) * weight.astype(jnp.float32)).astype(x.dtype)


# ----------------------------------- main ---------------------------------------
if __name__ == "__main__":
    key = jax.random.PRNGKey(0)
    kx, kw, kx2, kw2 = jax.random.split(key, 4)

    # Lane-dense case: batch=2, seq=512, d_model=128.
    B, L, D = 2, 512, 128
    x = jax.random.normal(kx, (B, L, D), jnp.float32)
    weight = 1.0 + 0.1 * jax.random.normal(kw, (D,), jnp.float32)

    fwd = jax.jit(rms_norm)
    out = jax.block_until_ready(fwd(x, weight))
    assert out.shape == x.shape
    ref = rms_norm_reference(x, weight)
    err = float(jnp.max(jnp.abs(out - ref)))
    if not err < 1e-5:
        raise SystemExit(f"kernel/reference mismatch (d=128): max abs err = {err}")

    # Narrow-feature case (d_model=32): packed lane-dense path (k=4 rows / vreg row).
    x_s = jax.random.normal(kx2, (2, 8, 32), jnp.float32)
    w_s = 1.0 + 0.1 * jax.random.normal(kw2, (32,), jnp.float32)
    out_s = jax.block_until_ready(jax.jit(rms_norm)(x_s, w_s))
    assert out_s.shape == x_s.shape
    ref_s = rms_norm_reference(x_s, w_s)
    err_s = float(jnp.max(jnp.abs(out_s - ref_s)))
    if not err_s < 1e-4:
        raise SystemExit(f"kernel/reference mismatch (d=32): max abs err = {err_s}")

    print("KERNEL_OK")
</pallas_src>

<mosaic_0001>
module attributes {stable_mosaic.version = 11 : i64} {
  func.func @_rmsnorm_kernel(%arg0: i32, %arg1: memref<1024x128xf32, #tpu.memory_space<vmem>>, %arg2: memref<1x128xf32, #tpu.memory_space<vmem>>, %arg3: memref<1024x128xf32, #tpu.memory_space<vmem>>) attributes {dimension_semantics = [#tpu.dimension_semantics<parallel>], iteration_bounds = array<i64: 1>, scalar_prefetch = 0 : i64, scratch_operands = 0 : i64, tpu.core_type = #tpu.core_type<tc>, window_params = [{transform_indices = @transform_0, window_bounds = array<i64: 1024, 128>}, {pipeline_mode = #tpu.pipeline_mode<synchronous>, transform_indices = @transform_1, window_bounds = array<i64: 1, 128>}, {transform_indices = @transform_2, window_bounds = array<i64: 1024, 128>}]} {
    %c0 = arith.constant 0 : index
    %c0_0 = arith.constant 0 : index
    %0 = vector.load %arg1[%c0, %c0_0] : memref<1024x128xf32, #tpu.memory_space<vmem>>, vector<1024x128xf32>
    %1 = arith.mulf %0, %0 : vector<1024x128xf32>
    %cst = arith.constant dense<0.000000e+00> : vector<1024xf32>
    %2 = vector.multi_reduction <add>, %1, %cst [1] : vector<1024x128xf32> to vector<1024xf32>
    %3 = vector.shape_cast %2 : vector<1024xf32> to vector<1024x1xf32>
    %cst_1 = arith.constant 1.280000e+02 : f32
    %4 = vector.broadcast %cst_1 : f32 to vector<1024x1xf32>
    %5 = arith.divf %3, %4 : vector<1024x1xf32>
    %cst_2 = arith.constant 9.99999974E-6 : f32
    %6 = vector.broadcast %cst_2 : f32 to vector<1024x1xf32>
    %7 = arith.addf %5, %6 : vector<1024x1xf32>
    %8 = math.rsqrt %7 : vector<1024x1xf32>
    %c0_3 = arith.constant 0 : index
    %c0_4 = arith.constant 0 : index
    %9 = vector.load %arg2[%c0_3, %c0_4] : memref<1x128xf32, #tpu.memory_space<vmem>>, vector<1x128xf32>
    %10 = vector.broadcast %8 : vector<1024x1xf32> to vector<1024x128xf32>
    %11 = arith.mulf %0, %10 : vector<1024x128xf32>
    %12 = vector.broadcast %9 : vector<1x128xf32> to vector<1024x128xf32>
    %13 = arith.mulf %11, %12 : vector<1024x128xf32>
    %c0_5 = arith.constant 0 : index
    %c0_6 = arith.constant 0 : index
    %14 = vector.load %arg3[%c0_5, %c0_6] : memref<1024x128xf32, #tpu.memory_space<vmem>>, vector<1024x128xf32>
    tpu.vector_store %arg3[%c0_5, %c0_6], %13 {strides = array<i32>} : memref<1024x128xf32, #tpu.memory_space<vmem>>, vector<1024x128xf32>,
    return
  }
  func.func @transform_0(%arg0: i32) -> (i32, i32) {
    %c0_i32 = arith.constant 0 : i32
    %c0_i32_0 = arith.constant 0 : i32
    return %arg0, %c0_i32 : i32, i32
  }
  func.func @transform_1(%arg0: i32) -> (i32, i32) {
    %c0_i32 = arith.constant 0 : i32
    %c0_i32_0 = arith.constant 0 : i32
    %c0_i32_1 = arith.constant 0 : i32
    return %c0_i32, %c0_i32_0 : i32, i32
  }
  func.func @transform_2(%arg0: i32) -> (i32, i32) {
    %c0_i32 = arith.constant 0 : i32
    %c0_i32_0 = arith.constant 0 : i32
    return %arg0, %c0_i32 : i32, i32
  }
}

</mosaic_0001>

<llo_original>
// kernel: rms_norm.1
$region0: #{rms_norm.1}
  #allocation0 [shape = 'u32[]', space=smem, size = 0x4, offset = 0x4, fixed_abs, tag = 'smem constant byte address 0x4 - core index']
  #allocation1 [shape = 'u32[144,128]{1,0:T(1,128)}', space=vmem, size = 0x12000, scoped, tag = 'internal scratch']
  %s0 = inlined_call_operand.hbm [shape: f32[1024,128], index: 0, kind: input, shape index: {}]
  %s1 = inlined_call_operand.vmem [shape: f32[1,128], index: 1, kind: input, shape index: {}]
  %s2 = inlined_call_operand.hbm [shape: f32[1024,128], index: 2, kind: output, shape index: {}]
  %s3 = sld [smem:[#allocation0]]
  $region22: #{rms_norm.1} parent=0
    _
  %s5 = ssub.s32 1, %s3
  %s6 = scalar_select 0, %s5, %s3
  $region1: #{rms_norm.1} parent=0
    #allocation2 [shape = 'u8[524288]{0}', space=vmem, size = 0x80000, scoped, tag = 'input window, operand 0, single buffered']
    #allocation3 [shape = 's32[1]{0}', space=sflag, size = 0x4, scoped, tag = 'scoped memory for rms_norm.1']
    #allocation4 [shape = 's32[1]{0}', space=sflag, size = 0x4, scoped, tag = 'scoped memory for rms_norm.1']
    #allocation5 [shape = 'u8[524288]{0}', space=vmem, size = 0x80000, scoped, tag = 'output window, operand 0, single buffered']
    %7 = vsyncpa [#allocation3], 0
    %8 = vsyncpa [#allocation4], 0
    // Predicated region
    $region2: #{rms_norm.1} parent=1 // pred_check
      _
    $region3: #{rms_norm.1} parent=1 // pred_check_branch
      %10 = sbr.rel (0) target = $region5
    $region4: #{rms_norm.1} parent=1 // pred_region
      %s12 = ssub.s32 16384, 16384
      %13 = vsyncadd [#allocation3], %s12
      %s14 = sshll.u32 [#allocation2], 4
      %s15 = int_to_ptr.vmem [resolvable:$true] %s14
      %20 = dma.hbm_to_vmem [thread:$0]  %s0, 16384, %s15, [#allocation3], 128, 128, 8
    $region5: #{rms_norm.1} parent=1 // pred_fallthru
      _
    // Predicated region
    $region6: #{rms_norm.1} parent=1 // pred_check
      _
    $region7: #{rms_norm.1} parent=1 // pred_check_branch
      %22 = sbr.rel (0) target = $region9
    $region8: #{rms_norm.1} parent=1 // pred_region
      _
    $region9: #{rms_norm.1} parent=1 // pred_fallthru
      _
    // Predicated region
    $region10: #{rms_norm.1} parent=1 // pred_check
      _
    $region11: #{rms_norm.1} parent=1 // pred_check_branch
      %24 = sbr.rel (0) target = $region13
    $region12: #{rms_norm.1} parent=1 // pred_region
      %25 = dma.done [#allocation3], 16384
    $region13: #{rms_norm.1} parent=1 // pred_fallthru
      _
    %v26 = vld [vmem:[#allocation2] sm:$0xff]
    %v27 = vld [vmem:[#allocation2 + $0x8] sm:$0xff]
    %v28 = vld [vmem:[#allocation2 + $0x10] sm:$0xff]
    %v29 = vld [vmem:[#allocation2 + $0x18] sm:$0xff]
    %v30 = vld [vmem:[#allocation2 + $0x20] sm:$0xff]
    %v31 = vld [vmem:[#allocation2 + $0x28] sm:$0xff]
    %v32 = vld [vmem:[#allocation2 + $0x30] sm:$0xff]
    %v33 = vld [vmem:[#allocation2 + $0x38] sm:$0xff]
    %v34 = vld [vmem:[#allocation2 + $0x40] sm:$0xff]
    %v35 = vld [vmem:[#allocation2 + $0x48] sm:$0xff]
    %v36 = vld [vmem:[#allocation2 + $0x50] sm:$0xff]
    %v37 = vld [vmem:[#allocation2 + $0x58] sm:$0xff]
    %v38 = vld [vmem:[#allocation2 + $0x60] sm:$0xff]
    %v39 = vld [vmem:[#allocation2 + $0x68] sm:$0xff]
    %v40 = vld [vmem:[#allocation2 + $0x70] sm:$0xff]
    %v41 = vld [vmem:[#allocation2 + $0x78] sm:$0xff]
    %v42 = vld [vmem:[#allocation2 + $0x80] sm:$0xff]
    %v43 = vld [vmem:[#allocation2 + $0x88] sm:$0xff]
    %v44 = vld [vmem:[#allocation2 + $0x90] sm:$0xff]
    %v45 = vld [vmem:[#allocation2 + $0x98] sm:$0xff]
    %v46 = vld [vmem:[#allocation2 + $0xa0] sm:$0xff]
    %v47 = vld [vmem:[#allocation2 + $0xa8] sm:$0xff]
    %v48 = vld [vmem:[#allocation2 + $0xb0] sm:$0xff]
    %v49 = vld [vmem:[#allocation2 + $0xb8] sm:$0xff]
    %v50 = vld [vmem:[#allocation2 + $0xc0] sm:$0xff]
    %v51 = vld [vmem:[#allocation2 + $0xc8] sm:$0xff]
    %v52 = vld [vmem:[#allocation2 + $0xd0] sm:$0xff]
    %v53 = vld [vmem:[#allocation2 + $0xd8] sm:$0xff]
    %v54 = vld [vmem:[#allocation2 + $0xe0] sm:$0xff]
    %v55 = vld [vmem:[#allocation2 + $0xe8] sm:$0xff]
    %v56 = vld [vmem:[#allocation2 + $0xf0] sm:$0xff]
    %v57 = vld [vmem:[#allocation2 + $0xf8] sm:$0xff]
    %v58 = vld [vmem:[#allocation2 + $0x100] sm:$0xff]
    %v59 = vld [vmem:[#allocation2 + $0x108] sm:$0xff]
    %v60 = vld [vmem:[#allocation2 + $0x110] sm:$0xff]
    %v61 = vld [vmem:[#allocation2 + $0x118] sm:$0xff]
    %v62 = vld [vmem:[#allocation2 + $0x120] sm:$0xff]
    %v63 = vld [vmem:[#allocation2 + $0x128] sm:$0xff]
    %v64 = vld [vmem:[#allocation2 + $0x130] sm:$0xff]
    %v65 = vld [vmem:[#allocation2 + $0x138] sm:$0xff]
    %v66 = vld [vmem:[#allocation2 + $0x140] sm:$0xff]
    %v67 = vld [vmem:[#allocation2 + $0x148] sm:$0xff]
    %v68 = vld [vmem:[#allocation2 + $0x150] sm:$0xff]
    %v69 = vld [vmem:[#allocation2 + $0x158] sm:$0xff]
    %v70 = vld [vmem:[#allocation2 + $0x160] sm:$0xff]
    %v71 = vld [vmem:[#allocation2 + $0x168] sm:$0xff]
    %v72 = vld [vmem:[#allocation2 + $0x170] sm:$0xff]
    %v73 = vld [vmem:[#allocation2 + $0x178] sm:$0xff]
    %v74 = vld [vmem:[#allocation2 + $0x180] sm:$0xff]
    %v75 = vld [vmem:[#allocation2 + $0x188] sm:$0xff]
    %v76 = vld [vmem:[#allocation2 + $0x190] sm:$0xff]
    %v77 = vld [vmem:[#allocation2 + $0x198] sm:$0xff]
    %v78 = vld [vmem:[#allocation2 + $0x1a0] sm:$0xff]
    %v79 = vld [vmem:[#allocation2 + $0x1a8] sm:$0xff]
    %v80 = vld [vmem:[#allocation2 + $0x1b0] sm:$0xff]
    %v81 = vld [vmem:[#allocation2 + $0x1b8] sm:$0xff]
    %v82 = vld [vmem:[#allocation2 + $0x1c0] sm:$0xff]
    %v83 = vld [vmem:[#allocation2 + $0x1c8] sm:$0xff]
    %v84 = vld [vmem:[#allocation2 + $0x1d0] sm:$0xff]
    %v85 = vld [vmem:[#allocation2 + $0x1d8] sm:$0xff]
    %v86 = vld [vmem:[#allocation2 + $0x1e0] sm:$0xff]
    %v87 = vld [vmem:[#allocation2 + $0x1e8] sm:$0xff]
    %v88 = vld [vmem:[#allocation2 + $0x1f0] sm:$0xff]
    %v89 = vld [vmem:[#allocation2 + $0x1f8] sm:$0xff]
    %v90 = vld [vmem:[#allocation2 + $0x200] sm:$0xff]
    %v91 = vld [vmem:[#allocation2 + $0x208] sm:$0xff]
    %v92 = vld [vmem:[#allocation2 + $0x210] sm:$0xff]
    %v93 = vld [vmem:[#allocation2 + $0x218] sm:$0xff]
    %v94 = vld [vmem:[#allocation2 + $0x220] sm:$0xff]
    %v95 = vld [vmem:[#allocation2 + $0x228] sm:$0xff]
    %v96 = vld [vmem:[#allocation2 + $0x230] sm:$0xff]
    %v97 = vld [vmem:[#allocation2 + $0x238] sm:$0xff]
    %v98 = vld [vmem:[#allocation2 + $0x240] sm:$0xff]
    %v99 = vld [vmem:[#allocation2 + $0x248] sm:$0xff]
    %v100 = vld [vmem:[#allocation2 + $0x250] sm:$0xff]
    %v101 = vld [vmem:[#allocation2 + $0x258] sm:$0xff]
    %v102 = vld [vmem:[#allocation2 + $0x260] sm:$0xff]
    %v103 = vld [vmem:[#allocation2 + $0x268] sm:$0xff]
    %v104 = vld [vmem:[#allocation2 + $0x270] sm:$0xff]
    %v105 = vld [vmem:[#allocation2 + $0x278] sm:$0xff]
    %v106 = vld [vmem:[#allocation2 + $0x280] sm:$0xff]
    %v107 = vld [vmem:[#allocation2 + $0x288] sm:$0xff]
    %v108 = vld [vmem:[#allocation2 + $0x290] sm:$0xff]
    %v109 = vld [vmem:[#allocation2 + $0x298] sm:$0xff]
    %v110 = vld [vmem:[#allocation2 + $0x2a0] sm:$0xff]
    %v111 = vld [vmem:[#allocation2 + $0x2a8] sm:$0xff]
    %v112 = vld [vmem:[#allocation2 + $0x2b0] sm:$0xff]
    %v113 = vld [vmem:[#allocation2 + $0x2b8] sm:$0xff]
    %v114 = vld [vmem:[#allocation2 + $0x2c0] sm:$0xff]
    %v115 = vld [vmem:[#allocation2 + $0x2c8] sm:$0xff]
    %v116 = vld [vmem:[#allocation2 + $0x2d0] sm:$0xff]
    %v117 = vld [vmem:[#allocation2 + $0x2d8] sm:$0xff]
    %v118 = vld [vmem:[#allocation2 + $0x2e0] sm:$0xff]
    %v119 = vld [vmem:[#allocation2 + $0x2e8] sm:$0xff]
    %v120 = vld [vmem:[#allocation2 + $0x2f0] sm:$0xff]
    %v121 = vld [vmem:[#allocation2 + $0x2f8] sm:$0xff]
    %v122 = vld [vmem:[#allocation2 + $0x300] sm:$0xff]
    %v123 = vld [vmem:[#allocation2 + $0x308] sm:$0xff]
    %v124 = vld [vmem:[#allocation2 + $0x310] sm:$0xff]
    %v125 = vld [vmem:[#allocation2 + $0x318] sm:$0xff]
    %v126 = vld [vmem:[#allocation2 + $0x320] sm:$0xff]
    %v127 = vld [vmem:[#allocation2 + $0x328] sm:$0xff]
    %v128 = vld [vmem:[#allocation2 + $0x330] sm:$0xff]
    %v129 = vld [vmem:[#allocation2 + $0x338] sm:$0xff]
    %v130 = vld [vmem:[#allocation2 + $0x340] sm:$0xff]
    %v131 = vld [vmem:[#allocation2 + $0x348] sm:$0xff]
    %v132 = vld [vmem:[#allocation2 + $0x350] sm:$0xff]
    %v133 = vld [vmem:[#allocation2 + $0x358] sm:$0xff]
    %v134 = vld [vmem:[#allocation2 + $0x360] sm:$0xff]
    %v135 = vld [vmem:[#allocation2 + $0x368] sm:$0xff]
    %v136 = vld [vmem:[#allocation2 + $0x370] sm:$0xff]
    %v137 = vld [vmem:[#allocation2 + $0x378] sm:$0xff]
    %v138 = vld [vmem:[#allocation2 + $0x380] sm:$0xff]
    %v139 = vld [vmem:[#allocation2 + $0x388] sm:$0xff]
    %v140 = vld [vmem:[#allocation2 + $0x390] sm:$0xff]
    %v141 = vld [vmem:[#allocation2 + $0x398] sm:$0xff]
    %v142 = vld [vmem:[#allocation2 + $0x3a0] sm:$0xff]
    %v143 = vld [vmem:[#allocation2 + $0x3a8] sm:$0xff]
    %v144 = vld [vmem:[#allocation2 + $0x3b0] sm:$0xff]
    %v145 = vld [vmem:[#allocation2 + $0x3b8] sm:$0xff]
    %v146 = vld [vmem:[#allocation2 + $0x3c0] sm:$0xff]
    %v147 = vld [vmem:[#allocation2 + $0x3c8] sm:$0xff]
    %v148 = vld [vmem:[#allocation2 + $0x3d0] sm:$0xff]
    %v149 = vld [vmem:[#allocation2 + $0x3d8] sm:$0xff]
    %v150 = vld [vmem:[#allocation2 + $0x3e0] sm:$0xff]
    %v151 = vld [vmem:[#allocation2 + $0x3e8] sm:$0xff]
    %v152 = vld [vmem:[#allocation2 + $0x3f0] sm:$0xff]
    %v153 = vld [vmem:[#allocation2 + $0x3f8] sm:$0xff]
    %v154 = vmul.f32 %v26, %v26
    %v155 = vmul.f32 %v27, %v27
    %v156 = vmul.f32 %v28, %v28
    %v157 = vmul.f32 %v29, %v29
    %v158 = vmul.f32 %v30, %v30
    %v159 = vmul.f32 %v31, %v31
    %v160 = vmul.f32 %v32, %v32
    %v161 = vmul.f32 %v33, %v33
    %v162 = vmul.f32 %v34, %v34
    %v163 = vmul.f32 %v35, %v35
    %v164 = vmul.f32 %v36, %v36
    %v165 = vmul.f32 %v37, %v37
    %v166 = vmul.f32 %v38, %v38
    %v167 = vmul.f32 %v39, %v39
    %v168 = vmul.f32 %v40, %v40
    %v169 = vmul.f32 %v41, %v41
    %v170 = vmul.f32 %v42, %v42
    %v171 = vmul.f32 %v43, %v43
    %v172 = vmul.f32 %v44, %v44
    %v173 = vmul.f32 %v45, %v45
    %v174 = vmul.f32 %v46, %v46
    %v175 = vmul.f32 %v47, %v47
    %v176 = vmul.f32 %v48, %v48
    %v177 = vmul.f32 %v49, %v49
    %v178 = vmul.f32 %v50, %v50
    %v179 = vmul.f32 %v51, %v51
    %v180 = vmul.f32 %v52, %v52
    %v181 = vmul.f32 %v53, %v53
    %v182 = vmul.f32 %v54, %v54
    %v183 = vmul.f32 %v55, %v55
    %v184 = vmul.f32 %v56, %v56
    %v185 = vmul.f32 %v57, %v57
    %v186 = vmul.f32 %v58, %v58
    %v187 = vmul.f32 %v59, %v59
    %v188 = vmul.f32 %v60, %v60
    %v189 = vmul.f32 %v61, %v61
    %v190 = vmul.f32 %v62, %v62
    %v191 = vmul.f32 %v63, %v63
    %v192 = vmul.f32 %v64, %v64
    %v193 = vmul.f32 %v65, %v65
    %v194 = vmul.f32 %v66, %v66
    %v195 = vmul.f32 %v67, %v67
    %v196 = vmul.f32 %v68, %v68
    %v197 = vmul.f32 %v69, %v69
    %v198 = vmul.f32 %v70, %v70
    %v199 = vmul.f32 %v71, %v71
    %v200 = vmul.f32 %v72, %v72
    %v201 = vmul.f32 %v73, %v73
    %v202 = vmul.f32 %v74, %v74
    %v203 = vmul.f32 %v75, %v75
    %v204 = vmul.f32 %v76, %v76
    %v205 = vmul.f32 %v77, %v77
    %v206 = vmul.f32 %v78, %v78
    %v207 = vmul.f32 %v79, %v79
    %v208 = vmul.f32 %v80, %v80
    %v209 = vmul.f32 %v81, %v81
    %v210 = vmul.f32 %v82, %v82
    %v211 = vmul.f32 %v83, %v83
    %v212 = vmul.f32 %v84, %v84
    %v213 = vmul.f32 %v85, %v85
    %v214 = vmul.f32 %v86, %v86
    %v215 = vmul.f32 %v87, %v87
    %v216 = vmul.f32 %v88, %v88
    %v217 = vmul.f32 %v89, %v89
    %v218 = vmul.f32 %v90, %v90
    %v219 = vmul.f32 %v91, %v91
    %v220 = vmul.f32 %v92, %v92
    %v221 = vmul.f32 %v93, %v93
    %v222 = vmul.f32 %v94, %v94
    %v223 = vmul.f32 %v95, %v95
    %v224 = vmul.f32 %v96, %v96
    %v225 = vmul.f32 %v97, %v97
    %v226 = vmul.f32 %v98, %v98
    %v227 = vmul.f32 %v99, %v99
    %v228 = vmul.f32 %v100, %v100
    %v229 = vmul.f32 %v101, %v101
    %v230 = vmul.f32 %v102, %v102
    %v231 = vmul.f32 %v103, %v103
    %v232 = vmul.f32 %v104, %v104
    %v233 = vmul.f32 %v105, %v105
    %v234 = vmul.f32 %v106, %v106
    %v235 = vmul.f32 %v107, %v107
    %v236 = vmul.f32 %v108, %v108
    %v237 = vmul.f32 %v109, %v109
    %v238 = vmul.f32 %v110, %v110
    %v239 = vmul.f32 %v111, %v111
    %v240 = vmul.f32 %v112, %v112
    %v241 = vmul.f32 %v113, %v113
    %v242 = vmul.f32 %v114, %v114
    %v243 = vmul.f32 %v115, %v115
    %v244 = vmul.f32 %v116, %v116
    %v245 = vmul.f32 %v117, %v117
    %v246 = vmul.f32 %v118, %v118
    %v247 = vmul.f32 %v119, %v119
    %v248 = vmul.f32 %v120, %v120
    %v249 = vmul.f32 %v121, %v121
    %v250 = vmul.f32 %v122, %v122
    %v251 = vmul.f32 %v123, %v123
    %v252 = vmul.f32 %v124, %v124
    %v253 = vmul.f32 %v125, %v125
    %v254 = vmul.f32 %v126, %v126
    %v255 = vmul.f32 %v127, %v127
    %v256 = vmul.f32 %v128, %v128
    %v257 = vmul.f32 %v129, %v129
    %v258 = vmul.f32 %v130, %v130
    %v259 = vmul.f32 %v131, %v131
    %v260 = vmul.f32 %v132, %v132
    %v261 = vmul.f32 %v133, %v133
    %v262 = vmul.f32 %v134, %v134
    %v263 = vmul.f32 %v135, %v135
    %v264 = vmul.f32 %v136, %v136
    %v265 = vmul.f32 %v137, %v137
    %v266 = vmul.f32 %v138, %v138
    %v267 = vmul.f32 %v139, %v139
    %v268 = vmul.f32 %v140, %v140
    %v269 = vmul.f32 %v141, %v141
    %v270 = vmul.f32 %v142, %v142
    %v271 = vmul.f32 %v143, %v143
    %v272 = vmul.f32 %v144, %v144
    %v273 = vmul.f32 %v145, %v145
    %v274 = vmul.f32 %v146, %v146
    %v275 = vmul.f32 %v147, %v147
    %v276 = vmul.f32 %v148, %v148
    %v277 = vmul.f32 %v149, %v149
    %v278 = vmul.f32 %v150, %v150
    %v279 = vmul.f32 %v151, %v151
    %v280 = vmul.f32 %v152, %v152
    %v281 = vmul.f32 %v153, %v153
    %282 = vadd.xlane.f32.xlu0 %v154
    %v283 = vpop.xlane.xlu0 %282
    %284 = vadd.xlane.f32.xlu0 %v155
    %v285 = vpop.xlane.xlu0 %284
    %286 = vadd.xlane.f32.xlu0 %v156
    %v287 = vpop.xlane.xlu0 %286
    %288 = vadd.xlane.f32.xlu0 %v157
    %v289 = vpop.xlane.xlu0 %288
    %290 = vadd.xlane.f32.xlu0 %v158
    %v291 = vpop.xlane.xlu0 %290
    %292 = vadd.xlane.f32.xlu0 %v159
    %v293 = vpop.xlane.xlu0 %292
    %294 = vadd.xlane.f32.xlu0 %v160
    %v295 = vpop.xlane.xlu0 %294
    %296 = vadd.xlane.f32.xlu0 %v161
    %v297 = vpop.xlane.xlu0 %296
    %298 = vadd.xlane.f32.xlu0 %v162
    %v299 = vpop.xlane.xlu0 %298
    %300 = vadd.xlane.f32.xlu0 %v163
    %v301 = vpop.xlane.xlu0 %300
    %302 = vadd.xlane.f32.xlu0 %v164
    %v303 = vpop.xlane.xlu0 %302
    %304 = vadd.xlane.f32.xlu0 %v165
    %v305 = vpop.xlane.xlu0 %304
    %306 = vadd.xlane.f32.xlu0 %v166
    %v307 = vpop.xlane.xlu0 %306
    %308 = vadd.xlane.f32.xlu0 %v167
    %v309 = vpop.xlane.xlu0 %308
    %310 = vadd.xlane.f32.xlu0 %v168
    %v311 = vpop.xlane.xlu0 %310
    %312 = vadd.xlane.f32.xlu0 %v169
    %v313 = vpop.xlane.xlu0 %312
    %314 = vadd.xlane.f32.xlu0 %v170
    %v315 = vpop.xlane.xlu0 %314
    %316 = vadd.xlane.f32.xlu0 %v171
    %v317 = vpop.xlane.xlu0 %316
    %318 = vadd.xlane.f32.xlu0 %v172
    %v319 = vpop.xlane.xlu0 %318
    %320 = vadd.xlane.f32.xlu0 %v173
    %v321 = vpop.xlane.xlu0 %320
    %322 = vadd.xlane.f32.xlu0 %v174
    %v323 = vpop.xlane.xlu0 %322
    %324 = vadd.xlane.f32.xlu0 %v175
    %v325 = vpop.xlane.xlu0 %324
    %326 = vadd.xlane.f32.xlu0 %v176
    %v327 = vpop.xlane.xlu0 %326
    %328 = vadd.xlane.f32.xlu0 %v177
    %v329 = vpop.xlane.xlu0 %328
    %330 = vadd.xlane.f32.xlu0 %v178
    %v331 = vpop.xlane.xlu0 %330
    %332 = vadd.xlane.f32.xlu0 %v179
    %v333 = vpop.xlane.xlu0 %332
    %334 = vadd.xlane.f32.xlu0 %v180
    %v335 = vpop.xlane.xlu0 %334
    %336 = vadd.xlane.f32.xlu0 %v181
    %v337 = vpop.xlane.xlu0 %336
    %338 = vadd.xlane.f32.xlu0 %v182
    %v339 = vpop.xlane.xlu0 %338
    %340 = vadd.xlane.f32.xlu0 %v183
    %v341 = vpop.xlane.xlu0 %340
    %342 = vadd.xlane.f32.xlu0 %v184
    %v343 = vpop.xlane.xlu0 %342
    %344 = vadd.xlane.f32.xlu0 %v185
    %v345 = vpop.xlane.xlu0 %344
    %346 = vadd.xlane.f32.xlu0 %v186
    %v347 = vpop.xlane.xlu0 %346
    %348 = vadd.xlane.f32.xlu0 %v187
    %v349 = vpop.xlane.xlu0 %348
    %350 = vadd.xlane.f32.xlu0 %v188
    %v351 = vpop.xlane.xlu0 %350
    %352 = vadd.xlane.f32.xlu0 %v189
    %v353 = vpop.xlane.xlu0 %352
    %354 = vadd.xlane.f32.xlu0 %v190
    %v355 = vpop.xlane.xlu0 %354
    %356 = vadd.xlane.f32.xlu0 %v191
    %v357 = vpop.xlane.xlu0 %356
    %358 = vadd.xlane.f32.xlu0 %v192
    %v359 = vpop.xlane.xlu0 %358
    %360 = vadd.xlane.f32.xlu0 %v193
    %v361 = vpop.xlane.xlu0 %360
    %362 = vadd.xlane.f32.xlu0 %v194
    %v363 = vpop.xlane.xlu0 %362
    %364 = vadd.xlane.f32.xlu0 %v195
    %v365 = vpop.xlane.xlu0 %364
    %366 = vadd.xlane.f32.xlu0 %v196
    %v367 = vpop.xlane.xlu0 %366
    %368 = vadd.xlane.f32.xlu0 %v197
    %v369 = vpop.xlane.xlu0 %368
    %370 = vadd.xlane.f32.xlu0 %v198
    %v371 = vpop.xlane.xlu0 %370
    %372 = vadd.xlane.f32.xlu0 %v199
    %v373 = vpop.xlane.xlu0 %372
    %374 = vadd.xlane.f32.xlu0 %v200
    %v375 = vpop.xlane.xlu0 %374
    %376 = vadd.xlane.f32.xlu0 %v201
    %v377 = vpop.xlane.xlu0 %376
    %378 = vadd.xlane.f32.xlu0 %v202
    %v379 = vpop.xlane.xlu0 %378
    %380 = vadd.xlane.f32.xlu0 %v203
    %v381 = vpop.xlane.xlu0 %380
    %382 = vadd.xlane.f32.xlu0 %v204
    %v383 = vpop.xlane.xlu0 %382
    %384 = vadd.xlane.f32.xlu0 %v205
    %v385 = vpop.xlane.xlu0 %384
    %386 = vadd.xlane.f32.xlu0 %v206
    %v387 = vpop.xlane.xlu0 %386
    %388 = vadd.xlane.f32.xlu0 %v207
    %v389 = vpop.xlane.xlu0 %388
    %390 = vadd.xlane.f32.xlu0 %v208
    %v391 = vpop.xlane.xlu0 %390
    %392 = vadd.xlane.f32.xlu0 %v209
    %v393 = vpop.xlane.xlu0 %392
    %394 = vadd.xlane.f32.xlu0 %v210
    %v395 = vpop.xlane.xlu0 %394
    %396 = vadd.xlane.f32.xlu0 %v211
    %v397 = vpop.xlane.xlu0 %396
    %398 = vadd.xlane.f32.xlu0 %v212
    %v399 = vpop.xlane.xlu0 %398
    %400 = vadd.xlane.f32.xlu0 %v213
    %v401 = vpop.xlane.xlu0 %400
    %402 = vadd.xlane.f32.xlu0 %v214
    %v403 = vpop.xlane.xlu0 %402
    %404 = vadd.xlane.f32.xlu0 %v215
    %v405 = vpop.xlane.xlu0 %404
    %406 = vadd.xlane.f32.xlu0 %v216
    %v407 = vpop.xlane.xlu0 %406
    %408 = vadd.xlane.f32.xlu0 %v217
    %v409 = vpop.xlane.xlu0 %408
    %410 = vadd.xlane.f32.xlu0 %v218
    %v411 = vpop.xlane.xlu0 %410
    %412 = vadd.xlane.f32.xlu0 %v219
    %v413 = vpop.xlane.xlu0 %412
    %414 = vadd.xlane.f32.xlu0 %v220
    %v415 = vpop.xlane.xlu0 %414
    %416 = vadd.xlane.f32.xlu0 %v221
    %v417 = vpop.xlane.xlu0 %416
    %418 = vadd.xlane.f32.xlu0 %v222
    %v419 = vpop.xlane.xlu0 %418
    %420 = vadd.xlane.f32.xlu0 %v223
    %v421 = vpop.xlane.xlu0 %420
    %422 = vadd.xlane.f32.xlu0 %v224
    %v423 = vpop.xlane.xlu0 %422
    %424 = vadd.xlane.f32.xlu0 %v225
    %v425 = vpop.xlane.xlu0 %424
    %426 = vadd.xlane.f32.xlu0 %v226
    %v427 = vpop.xlane.xlu0 %426
    %428 = vadd.xlane.f32.xlu0 %v227
    %v429 = vpop.xlane.xlu0 %428
    %430 = vadd.xlane.f32.xlu0 %v228
    %v431 = vpop.xlane.xlu0 %430
    %432 = vadd.xlane.f32.xlu0 %v229
    %v433 = vpop.xlane.xlu0 %432
    %434 = vadd.xlane.f32.xlu0 %v230
    %v435 = vpop.xlane.xlu0 %434
    %436 = vadd.xlane.f32.xlu0 %v231
    %v437 = vpop.xlane.xlu0 %436
    %438 = vadd.xlane.f32.xlu0 %v232
    %v439 = vpop.xlane.xlu0 %438
    %440 = vadd.xlane.f32.xlu0 %v233
    %v441 = vpop.xlane.xlu0 %440
    %442 = vadd.xlane.f32.xlu0 %v234
    %v443 = vpop.xlane.xlu0 %442
    %444 = vadd.xlane.f32.xlu0 %v235
    %v445 = vpop.xlane.xlu0 %444
    %446 = vadd.xlane.f32.xlu0 %v236
    %v447 = vpop.xlane.xlu0 %446
    %448 = vadd.xlane.f32.xlu0 %v237
    %v449 = vpop.xlane.xlu0 %448
    %450 = vadd.xlane.f32.xlu0 %v238
    %v451 = vpop.xlane.xlu0 %450
    %452 = vadd.xlane.f32.xlu0 %v239
    %v453 = vpop.xlane.xlu0 %452
    %454 = vadd.xlane.f32.xlu0 %v240
    %v455 = vpop.xlane.xlu0 %454
    %456 = vadd.xlane.f32.xlu0 %v241
    %v457 = vpop.xlane.xlu0 %456
    %458 = vadd.xlane.f32.xlu0 %v242
    %v459 = vpop.xlane.xlu0 %458
    %460 = vadd.xlane.f32.xlu0 %v243
    %v461 = vpop.xlane.xlu0 %460
    %462 = vadd.xlane.f32.xlu0 %v244
    %v463 = vpop.xlane.xlu0 %462
    %464 = vadd.xlane.f32.xlu0 %v245
    %v465 = vpop.xlane.xlu0 %464
    %466 = vadd.xlane.f32.xlu0 %v246
    %v467 = vpop.xlane.xlu0 %466
    %468 = vadd.xlane.f32.xlu0 %v247
    %v469 = vpop.xlane.xlu0 %468
    %470 = vadd.xlane.f32.xlu0 %v248
    %v471 = vpop.xlane.xlu0 %470
    %472 = vadd.xlane.f32.xlu0 %v249
    %v473 = vpop.xlane.xlu0 %472
    %474 = vadd.xlane.f32.xlu0 %v250
    %v475 = vpop.xlane.xlu0 %474
    %476 = vadd.xlane.f32.xlu0 %v251
    %v477 = vpop.xlane.xlu0 %476
    %478 = vadd.xlane.f32.xlu0 %v252
    %v479 = vpop.xlane.xlu0 %478
    %480 = vadd.xlane.f32.xlu0 %v253
    %v481 = vpop.xlane.xlu0 %480
    %482 = vadd.xlane.f32.xlu0 %v254
    %v483 = vpop.xlane.xlu0 %482
    %484 = vadd.xlane.f32.xlu0 %v255
    %v485 = vpop.xlane.xlu0 %484
    %486 = vadd.xlane.f32.xlu0 %v256
    %v487 = vpop.xlane.xlu0 %486
    %488 = vadd.xlane.f32.xlu0 %v257
    %v489 = vpop.xlane.xlu0 %488
    %490 = vadd.xlane.f32.xlu0 %v258
    %v491 = vpop.xlane.xlu0 %490
    %492 = vadd.xlane.f32.xlu0 %v259
    %v493 = vpop.xlane.xlu0 %492
    %494 = vadd.xlane.f32.xlu0 %v260
    %v495 = vpop.xlane.xlu0 %494
    %496 = vadd.xlane.f32.xlu0 %v261
    %v497 = vpop.xlane.xlu0 %496
    %498 = vadd.xlane.f32.xlu0 %v262
    %v499 = vpop.xlane.xlu0 %498
    %500 = vadd.xlane.f32.xlu0 %v263
    %v501 = vpop.xlane.xlu0 %500
    %502 = vadd.xlane.f32.xlu0 %v264
    %v503 = vpop.xlane.xlu0 %502
    %504 = vadd.xlane.f32.xlu0 %v265
    %v505 = vpop.xlane.xlu0 %504
    %506 = vadd.xlane.f32.xlu0 %v266
    %v507 = vpop.xlane.xlu0 %506
    %508 = vadd.xlane.f32.xlu0 %v267
    %v509 = vpop.xlane.xlu0 %508
    %510 = vadd.xlane.f32.xlu0 %v268
    %v511 = vpop.xlane.xlu0 %510
    %512 = vadd.xlane.f32.xlu0 %v269
    %v513 = vpop.xlane.xlu0 %512
    %514 = vadd.xlane.f32.xlu0 %v270
    %v515 = vpop.xlane.xlu0 %514
    %516 = vadd.xlane.f32.xlu0 %v271
    %v517 = vpop.xlane.xlu0 %516
    %518 = vadd.xlane.f32.xlu0 %v272
    %v519 = vpop.xlane.xlu0 %518
    %520 = vadd.xlane.f32.xlu0 %v273
    %v521 = vpop.xlane.xlu0 %520
    %522 = vadd.xlane.f32.xlu0 %v274
    %v523 = vpop.xlane.xlu0 %522
    %524 = vadd.xlane.f32.xlu0 %v275
    %v525 = vpop.xlane.xlu0 %524
    %526 = vadd.xlane.f32.xlu0 %v276
    %v527 = vpop.xlane.xlu0 %526
    %528 = vadd.xlane.f32.xlu0 %v277
    %v529 = vpop.xlane.xlu0 %528
    %530 = vadd.xlane.f32.xlu0 %v278
    %v531 = vpop.xlane.xlu0 %530
    %532 = vadd.xlane.f32.xlu0 %v279
    %v533 = vpop.xlane.xlu0 %532
    %534 = vadd.xlane.f32.xlu0 %v280
    %v535 = vpop.xlane.xlu0 %534
    %536 = vadd.xlane.f32.xlu0 %v281
    %v537 = vpop.xlane.xlu0 %536
    %v538 = vrcp.pop 128.0
    %v539 = vmul.f32 %v283, %v538
    %v540 = vmul.f32 %v285, %v538
    %v541 = vmul.f32 %v287, %v538
    %v542 = vmul.f32 %v289, %v538
    %v543 = vmul.f32 %v291, %v538
    %v544 = vmul.f32 %v293, %v538
    %v545 = vmul.f32 %v295, %v538
    %v546 = vmul.f32 %v297, %v538
    %v547 = vmul.f32 %v299, %v538
    %v548 = vmul.f32 %v301, %v538
    %v549 = vmul.f32 %v303, %v538
    %v550 = vmul.f32 %v305, %v538
    %v551 = vmul.f32 %v307, %v538
    %v552 = vmul.f32 %v309, %v538
    %v553 = vmul.f32 %v311, %v538
    %v554 = vmul.f32 %v313, %v538
    %v555 = vmul.f32 %v315, %v538
    %v556 = vmul.f32 %v317, %v538
    %v557 = vmul.f32 %v319, %v538
    %v558 = vmul.f32 %v321, %v538
    %v559 = vmul.f32 %v323, %v538
    %v560 = vmul.f32 %v325, %v538
    %v561 = vmul.f32 %v327, %v538
    %v562 = vmul.f32 %v329, %v538
    %v563 = vmul.f32 %v331, %v538
    %v564 = vmul.f32 %v333, %v538
    %v565 = vmul.f32 %v335, %v538
    %v566 = vmul.f32 %v337, %v538
    %v567 = vmul.f32 %v339, %v538
    %v568 = vmul.f32 %v341, %v538
    %v569 = vmul.f32 %v343, %v538
    %v570 = vmul.f32 %v345, %v538
    %v571 = vmul.f32 %v347, %v538
    %v572 = vmul.f32 %v349, %v538
    %v573 = vmul.f32 %v351, %v538
    %v574 = vmul.f32 %v353, %v538
    %v575 = vmul.f32 %v355, %v538
    %v576 = vmul.f32 %v357, %v538
    %v577 = vmul.f32 %v359, %v538
    %v578 = vmul.f32 %v361, %v538
    %v579 = vmul.f32 %v363, %v538
    %v580 = vmul.f32 %v365, %v538
    %v581 = vmul.f32 %v367, %v538
    %v582 = vmul.f32 %v369, %v538
    %v583 = vmul.f32 %v371, %v538
    %v584 = vmul.f32 %v373, %v538
    %v585 = vmul.f32 %v375, %v538
    %v586 = vmul.f32 %v377, %v538
    %v587 = vmul.f32 %v379, %v538
    %v588 = vmul.f32 %v381, %v538
    %v589 = vmul.f32 %v383, %v538
    %v590 = vmul.f32 %v385, %v538
    %v591 = vmul.f32 %v387, %v538
    %v592 = vmul.f32 %v389, %v538
    %v593 = vmul.f32 %v391, %v538
    %v594 = vmul.f32 %v393, %v538
    %v595 = vmul.f32 %v395, %v538
    %v596 = vmul.f32 %v397, %v538
    %v597 = vmul.f32 %v399, %v538
    %v598 = vmul.f32 %v401, %v538
    %v599 = vmul.f32 %v403, %v538
    %v600 = vmul.f32 %v405, %v538
    %v601 = vmul.f32 %v407, %v538
    %v602 = vmul.f32 %v409, %v538
    %v603 = vmul.f32 %v411, %v538
    %v604 = vmul.f32 %v413, %v538
    %v605 = vmul.f32 %v415, %v538
    %v606 = vmul.f32 %v417, %v538
    %v607 = vmul.f32 %v419, %v538
    %v608 = vmul.f32 %v421, %v538
    %v609 = vmul.f32 %v423, %v538
    %v610 = vmul.f32 %v425, %v538
    %v611 = vmul.f32 %v427, %v538
    %v612 = vmul.f32 %v429, %v538
    %v613 = vmul.f32 %v431, %v538
    %v614 = vmul.f32 %v433, %v538
    %v615 = vmul.f32 %v435, %v538
    %v616 = vmul.f32 %v437, %v538
    %v617 = vmul.f32 %v439, %v538
    %v618 = vmul.f32 %v441, %v538
    %v619 = vmul.f32 %v443, %v538
    %v620 = vmul.f32 %v445, %v538
    %v621 = vmul.f32 %v447, %v538
    %v622 = vmul.f32 %v449, %v538
    %v623 = vmul.f32 %v451, %v538
    %v624 = vmul.f32 %v453, %v538
    %v625 = vmul.f32 %v455, %v538
    %v626 = vmul.f32 %v457, %v538
    %v627 = vmul.f32 %v459, %v538
    %v628 = vmul.f32 %v461, %v538
    %v629 = vmul.f32 %v463, %v538
    %v630 = vmul.f32 %v465, %v538
    %v631 = vmul.f32 %v467, %v538
    %v632 = vmul.f32 %v469, %v538
    %v633 = vmul.f32 %v471, %v538
    %v634 = vmul.f32 %v473, %v538
    %v635 = vmul.f32 %v475, %v538
    %v636 = vmul.f32 %v477, %v538
    %v637 = vmul.f32 %v479, %v538
    %v638 = vmul.f32 %v481, %v538
    %v639 = vmul.f32 %v483, %v538
    %v640 = vmul.f32 %v485, %v538
    %v641 = vmul.f32 %v487, %v538
    %v642 = vmul.f32 %v489, %v538
    %v643 = vmul.f32 %v491, %v538
    %v644 = vmul.f32 %v493, %v538
    %v645 = vmul.f32 %v495, %v538
    %v646 = vmul.f32 %v497, %v538
    %v647 = vmul.f32 %v499, %v538
    %v648 = vmul.f32 %v501, %v538
    %v649 = vmul.f32 %v503, %v538
    %v650 = vmul.f32 %v505, %v538
    %v651 = vmul.f32 %v507, %v538
    %v652 = vmul.f32 %v509, %v538
    %v653 = vmul.f32 %v511, %v538
    %v654 = vmul.f32 %v513, %v538
    %v655 = vmul.f32 %v515, %v538
    %v656 = vmul.f32 %v517, %v538
    %v657 = vmul.f32 %v519, %v538
    %v658 = vmul.f32 %v521, %v538
    %v659 = vmul.f32 %v523, %v538
    %v660 = vmul.f32 %v525, %v538
    %v661 = vmul.f32 %v527, %v538
    %v662 = vmul.f32 %v529, %v538
    %v663 = vmul.f32 %v531, %v538
    %v664 = vmul.f32 %v533, %v538
    %v665 = vmul.f32 %v535, %v538
    %v666 = vmul.f32 %v537, %v538
    %v667 = vadd.f32 %v539, 1e-05
    %v668 = vadd.f32 %v540, 1e-05
    %v669 = vadd.f32 %v541, 1e-05
    %v670 = vadd.f32 %v542, 1e-05
    %v671 = vadd.f32 %v543, 1e-05
    %v672 = vadd.f32 %v544, 1e-05
    %v673 = vadd.f32 %v545, 1e-05
    %v674 = vadd.f32 %v546, 1e-05
    %v675 = vadd.f32 %v547, 1e-05
    %v676 = vadd.f32 %v548, 1e-05
    %v677 = vadd.f32 %v549, 1e-05
    %v678 = vadd.f32 %v550, 1e-05
    %v679 = vadd.f32 %v551, 1e-05
    %v680 = vadd.f32 %v552, 1e-05
    %v681 = vadd.f32 %v553, 1e-05
    %v682 = vadd.f32 %v554, 1e-05
    %v683 = vadd.f32 %v555, 1e-05
    %v684 = vadd.f32 %v556, 1e-05
    %v685 = vadd.f32 %v557, 1e-05
    %v686 = vadd.f32 %v558, 1e-05
    %v687 = vadd.f32 %v559, 1e-05
    %v688 = vadd.f32 %v560, 1e-05
    %v689 = vadd.f32 %v561, 1e-05
    %v690 = vadd.f32 %v562, 1e-05
    %v691 = vadd.f32 %v563, 1e-05
    %v692 = vadd.f32 %v564, 1e-05
    %v693 = vadd.f32 %v565, 1e-05
    %v694 = vadd.f32 %v566, 1e-05
    %v695 = vadd.f32 %v567, 1e-05
    %v696 = vadd.f32 %v568, 1e-05
    %v697 = vadd.f32 %v569, 1e-05
    %v698 = vadd.f32 %v570, 1e-05
    %v699 = vadd.f32 %v571, 1e-05
    %v700 = vadd.f32 %v572, 1e-05
    %v701 = vadd.f32 %v573, 1e-05
    %v702 = vadd.f32 %v574, 1e-05
    %v703 = vadd.f32 %v575, 1e-05
    %v704 = vadd.f32 %v576, 1e-05
    %v705 = vadd.f32 %v577, 1e-05
    %v706 = vadd.f32 %v578, 1e-05
    %v707 = vadd.f32 %v579, 1e-05
    %v708 = vadd.f32 %v580, 1e-05
    %v709 = vadd.f32 %v581, 1e-05
    %v710 = vadd.f32 %v582, 1e-05
    %v711 = vadd.f32 %v583, 1e-05
    %v712 = vadd.f32 %v584, 1e-05
    %v713 = vadd.f32 %v585, 1e-05
    %v714 = vadd.f32 %v586, 1e-05
    %v715 = vadd.f32 %v587, 1e-05
    %v716 = vadd.f32 %v588, 1e-05
    %v717 = vadd.f32 %v589, 1e-05
    %v718 = vadd.f32 %v590, 1e-05
    %v719 = vadd.f32 %v591, 1e-05
    %v720 = vadd.f32 %v592, 1e-05
    %v721 = vadd.f32 %v593, 1e-05
    %v722 = vadd.f32 %v594, 1e-05
    %v723 = vadd.f32 %v595, 1e-05
    %v724 = vadd.f32 %v596, 1e-05
    %v725 = vadd.f32 %v597, 1e-05
    %v726 = vadd.f32 %v598, 1e-05
    %v727 = vadd.f32 %v599, 1e-05
    %v728 = vadd.f32 %v600, 1e-05
    %v729 = vadd.f32 %v601, 1e-05
    %v730 = vadd.f32 %v602, 1e-05
    %v731 = vadd.f32 %v603, 1e-05
    %v732 = vadd.f32 %v604, 1e-05
    %v733 = vadd.f32 %v605, 1e-05
    %v734 = vadd.f32 %v606, 1e-05
    %v735 = vadd.f32 %v607, 1e-05
    %v736 = vadd.f32 %v608, 1e-05
    %v737 = vadd.f32 %v609, 1e-05
    %v738 = vadd.f32 %v610, 1e-05
    %v739 = vadd.f32 %v611, 1e-05
    %v740 = vadd.f32 %v612, 1e-05
    %v741 = vadd.f32 %v613, 1e-05
    %v742 = vadd.f32 %v614, 1e-05
    %v743 = vadd.f32 %v615, 1e-05
    %v744 = vadd.f32 %v616, 1e-05
    %v745 = vadd.f32 %v617, 1e-05
    %v746 = vadd.f32 %v618, 1e-05
    %v747 = vadd.f32 %v619, 1e-05
    %v748 = vadd.f32 %v620, 1e-05
    %v749 = vadd.f32 %v621, 1e-05
    %v750 = vadd.f32 %v622, 1e-05
    %v751 = vadd.f32 %v623, 1e-05
    %v752 = vadd.f32 %v624, 1e-05
    %v753 = vadd.f32 %v625, 1e-05
    %v754 = vadd.f32 %v626, 1e-05
    %v755 = vadd.f32 %v627, 1e-05
    %v756 = vadd.f32 %v628, 1e-05
    %v757 = vadd.f32 %v629, 1e-05
    %v758 = vadd.f32 %v630, 1e-05
    %v759 = vadd.f32 %v631, 1e-05
    %v760 = vadd.f32 %v632, 1e-05
    %v761 = vadd.f32 %v633, 1e-05
    %v762 = vadd.f32 %v634, 1e-05
    %v763 = vadd.f32 %v635, 1e-05
    %v764 = vadd.f32 %v636, 1e-05
    %v765 = vadd.f32 %v637, 1e-05
    %v766 = vadd.f32 %v638, 1e-05
    %v767 = vadd.f32 %v639, 1e-05
    %v768 = vadd.f32 %v640, 1e-05
    %v769 = vadd.f32 %v641, 1e-05
    %v770 = vadd.f32 %v642, 1e-05
    %v771 = vadd.f32 %v643, 1e-05
    %v772 = vadd.f32 %v644, 1e-05
    %v773 = vadd.f32 %v645, 1e-05
    %v774 = vadd.f32 %v646, 1e-05
    %v775 = vadd.f32 %v647, 1e-05
    %v776 = vadd.f32 %v648, 1e-05
    %v777 = vadd.f32 %v649, 1e-05
    %v778 = vadd.f32 %v650, 1e-05
    %v779 = vadd.f32 %v651, 1e-05
    %v780 = vadd.f32 %v652, 1e-05
    %v781 = vadd.f32 %v653, 1e-05
    %v782 = vadd.f32 %v654, 1e-05
    %v783 = vadd.f32 %v655, 1e-05
    %v784 = vadd.f32 %v656, 1e-05
    %v785 = vadd.f32 %v657, 1e-05
    %v786 = vadd.f32 %v658, 1e-05
    %v787 = vadd.f32 %v659, 1e-05
    %v788 = vadd.f32 %v660, 1e-05
    %v789 = vadd.f32 %v661, 1e-05
    %v790 = vadd.f32 %v662, 1e-05
    %v791 = vadd.f32 %v663, 1e-05
    %v792 = vadd.f32 %v664, 1e-05
    %v793 = vadd.f32 %v665, 1e-05
    %v794 = vadd.f32 %v666, 1e-05
    %v795 = vrsqrt.pop %v667
    %v796 = vrsqrt.pop %v668
    %v797 = vrsqrt.pop %v669
    %v798 = vrsqrt.pop %v670
    %v799 = vrsqrt.pop %v671
    %v800 = vrsqrt.pop %v672
    %v801 = vrsqrt.pop %v673
    %v802 = vrsqrt.pop %v674
    %v803 = vrsqrt.pop %v675
    %v804 = vrsqrt.pop %v676
    %v805 = vrsqrt.pop %v677
    %v806 = vrsqrt.pop %v678
    %v807 = vrsqrt.pop %v679
    %v808 = vrsqrt.pop %v680
    %v809 = vrsqrt.pop %v681
    %v810 = vrsqrt.pop %v682
    %v811 = vrsqrt.pop %v683
    %v812 = vrsqrt.pop %v684
    %v813 = vrsqrt.pop %v685
    %v814 = vrsqrt.pop %v686
    %v815 = vrsqrt.pop %v687
    %v816 = vrsqrt.pop %v688
    %v817 = vrsqrt.pop %v689
    %v818 = vrsqrt.pop %v690
    %v819 = vrsqrt.pop %v691
    %v820 = vrsqrt.pop %v692
    %v821 = vrsqrt.pop %v693
    %v822 = vrsqrt.pop %v694
    %v823 = vrsqrt.pop %v695
    %v824 = vrsqrt.pop %v696
    %v825 = vrsqrt.pop %v697
    %v826 = vrsqrt.pop %v698
    %v827 = vrsqrt.pop %v699
    %v828 = vrsqrt.pop %v700
    %v829 = vrsqrt.pop %v701
    %v830 = vrsqrt.pop %v702
    %v831 = vrsqrt.pop %v703
    %v832 = vrsqrt.pop %v704
    %v833 = vrsqrt.pop %v705
    %v834 = vrsqrt.pop %v706
    %v835 = vrsqrt.pop %v707
    %v836 = vrsqrt.pop %v708
    %v837 = vrsqrt.pop %v709
    %v838 = vrsqrt.pop %v710
    %v839 = vrsqrt.pop %v711
    %v840 = vrsqrt.pop %v712
    %v841 = vrsqrt.pop %v713
    %v842 = vrsqrt.pop %v714
    %v843 = vrsqrt.pop %v715
    %v844 = vrsqrt.pop %v716
    %v845 = vrsqrt.pop %v717
    %v846 = vrsqrt.pop %v718
    %v847 = vrsqrt.pop %v719
    %v848 = vrsqrt.pop %v720
    %v849 = vrsqrt.pop %v721
    %v850 = vrsqrt.pop %v722
    %v851 = vrsqrt.pop %v723
    %v852 = vrsqrt.pop %v724
    %v853 = vrsqrt.pop %v725
    %v854 = vrsqrt.pop %v726
    %v855 = vrsqrt.pop %v727
    %v856 = vrsqrt.pop %v728
    %v857 = vrsqrt.pop %v729
    %v858 = vrsqrt.pop %v730
    %v859 = vrsqrt.pop %v731
    %v860 = vrsqrt.pop %v732
    %v861 = vrsqrt.pop %v733
    %v862 = vrsqrt.pop %v734
    %v863 = vrsqrt.pop %v735
    %v864 = vrsqrt.pop %v736
    %v865 = vrsqrt.pop %v737
    %v866 = vrsqrt.pop %v738
    %v867 = vrsqrt.pop %v739
    %v868 = vrsqrt.pop %v740
    %v869 = vrsqrt.pop %v741
    %v870 = vrsqrt.pop %v742
    %v871 = vrsqrt.pop %v743
    %v872 = vrsqrt.pop %v744
    %v873 = vrsqrt.pop %v745
    %v874 = vrsqrt.pop %v746
    %v875 = vrsqrt.pop %v747
    %v876 = vrsqrt.pop %v748
    %v877 = vrsqrt.pop %v749
    %v878 = vrsqrt.pop %v750
    %v879 = vrsqrt.pop %v751
    %v880 = vrsqrt.pop %v752
    %v881 = vrsqrt.pop %v753
    %v882 = vrsqrt.pop %v754
    %v883 = vrsqrt.pop %v755
    %v884 = vrsqrt.pop %v756
    %v885 = vrsqrt.pop %v757
    %v886 = vrsqrt.pop %v758
    %v887 = vrsqrt.pop %v759
    %v888 = vrsqrt.pop %v760
    %v889 = vrsqrt.pop %v761
    %v890 = vrsqrt.pop %v762
    %v891 = vrsqrt.pop %v763
    %v892 = vrsqrt.pop %v764
    %v893 = vrsqrt.pop %v765
    %v894 = vrsqrt.pop %v766
    %v895 = vrsqrt.pop %v767
    %v896 = vrsqrt.pop %v768
    %v897 = vrsqrt.pop %v769
    %v898 = vrsqrt.pop %v770
    %v899 = vrsqrt.pop %v771
    %v900 = vrsqrt.pop %v772
    %v901 = vrsqrt.pop %v773
    %v902 = vrsqrt.pop %v774
    %v903 = vrsqrt.pop %v775
    %v904 = vrsqrt.pop %v776
    %v905 = vrsqrt.pop %v777
    %v906 = vrsqrt.pop %v778
    %v907 = vrsqrt.pop %v779
    %v908 = vrsqrt.pop %v780
    %v909 = vrsqrt.pop %v781
    %v910 = vrsqrt.pop %v782
    %v911 = vrsqrt.pop %v783
    %v912 = vrsqrt.pop %v784
    %v913 = vrsqrt.pop %v785
    %v914 = vrsqrt.pop %v786
    %v915 = vrsqrt.pop %v787
    %v916 = vrsqrt.pop %v788
    %v917 = vrsqrt.pop %v789
    %v918 = vrsqrt.pop %v790
    %v919 = vrsqrt.pop %v791
    %v920 = vrsqrt.pop %v792
    %v921 = vrsqrt.pop %v793
    %v922 = vrsqrt.pop %v794
    %v923 = vld [vmem:[%s1] sm:$0x1]
    %v924 = vmul.f32 %v26, %v795
    %v925 = vmul.f32 %v27, %v796
    %v926 = vmul.f32 %v28, %v797
    %v927 = vmul.f32 %v29, %v798
    %v928 = vmul.f32 %v30, %v799
    %v929 = vmul.f32 %v31, %v800
    %v930 = vmul.f32 %v32, %v801
    %v931 = vmul.f32 %v33, %v802
    %v932 = vmul.f32 %v34, %v803
    %v933 = vmul.f32 %v35, %v804
    %v934 = vmul.f32 %v36, %v805
    %v935 = vmul.f32 %v37, %v806
    %v936 = vmul.f32 %v38, %v807
    %v937 = vmul.f32 %v39, %v808
    %v938 = vmul.f32 %v40, %v809
    %v939 = vmul.f32 %v41, %v810
    %v940 = vmul.f32 %v42, %v811
    %v941 = vmul.f32 %v43, %v812
    %v942 = vmul.f32 %v44, %v813
    %v943 = vmul.f32 %v45, %v814
    %v944 = vmul.f32 %v46, %v815
    %v945 = vmul.f32 %v47, %v816
    %v946 = vmul.f32 %v48, %v817
    %v947 = vmul.f32 %v49, %v818
    %v948 = vmul.f32 %v50, %v819
    %v949 = vmul.f32 %v51, %v820
    %v950 = vmul.f32 %v52, %v821
    %v951 = vmul.f32 %v53, %v822
    %v952 = vmul.f32 %v54, %v823
    %v953 = vmul.f32 %v55, %v824
    %v954 = vmul.f32 %v56, %v825
    %v955 = vmul.f32 %v57, %v826
    %v956 = vmul.f32 %v58, %v827
    %v957 = vmul.f32 %v59, %v828
    %v958 = vmul.f32 %v60, %v829
    %v959 = vmul.f32 %v61, %v830
    %v960 = vmul.f32 %v62, %v831
    %v961 = vmul.f32 %v63, %v832
    %v962 = vmul.f32 %v64, %v833
    %v963 = vmul.f32 %v65, %v834
    %v964 = vmul.f32 %v66, %v835
    %v965 = vmul.f32 %v67, %v836
    %v966 = vmul.f32 %v68, %v837
    %v967 = vmul.f32 %v69, %v838
    %v968 = vmul.f32 %v70, %v839
    %v969 = vmul.f32 %v71, %v840
    %v970 = vmul.f32 %v72, %v841
    %v971 = vmul.f32 %v73, %v842
    %v972 = vmul.f32 %v74, %v843
    %v973 = vmul.f32 %v75, %v844
    %v974 = vmul.f32 %v76, %v845
    %v975 = vmul.f32 %v77, %v846
    %v976 = vmul.f32 %v78, %v847
    %v977 = vmul.f32 %v79, %v848
    %v978 = vmul.f32 %v80, %v849
    %v979 = vmul.f32 %v81, %v850
    %v980 = vmul.f32 %v82, %v851
    %v981 = vmul.f32 %v83, %v852
    %v982 = vmul.f32 %v84, %v853
    %v983 = vmul.f32 %v85, %v854
    %v984 = vmul.f32 %v86, %v855
    %v985 = vmul.f32 %v87, %v856
    %v986 = vmul.f32 %v88, %v857
    %v987 = vmul.f32 %v89, %v858
    %v988 = vmul.f32 %v90, %v859
    %v989 = vmul.f32 %v91, %v860
    %v990 = vmul.f32 %v92, %v861
    %v991 = vmul.f32 %v93, %v862
    %v992 = vmul.f32 %v94, %v863
    %v993 = vmul.f32 %v95, %v864
    %v994 = vmul.f32 %v96, %v865
    %v995 = vmul.f32 %v97, %v866
    %v996 = vmul.f32 %v98, %v867
    %v997 = vmul.f32 %v99, %v868
    %v998 = vmul.f32 %v100, %v869
    %v999 = vmul.f32 %v101, %v870
    %v1000 = vmul.f32 %v102, %v871
    %v1001 = vmul.f32 %v103, %v872
    %v1002 = vmul.f32 %v104, %v873
    %v1003 = vmul.f32 %v105, %v874
    %v1004 = vmul.f32 %v106, %v875
    %v1005 = vmul.f32 %v107, %v876
    %v1006 = vmul.f32 %v108, %v877
    %v1007 = vmul.f32 %v109, %v878
    %v1008 = vmul.f32 %v110, %v879
    %v1009 = vmul.f32 %v111, %v880
    %v1010 = vmul.f32 %v112, %v881
    %v1011 = vmul.f32 %v113, %v882
    %v1012 = vmul.f32 %v114, %v883
    %v1013 = vmul.f32 %v115, %v884
    %v1014 = vmul.f32 %v116, %v885
    %v1015 = vmul.f32 %v117, %v886
    %v1016 = vmul.f32 %v118, %v887
    %v1017 = vmul.f32 %v119, %v888
    %v1018 = vmul.f32 %v120, %v889
    %v1019 = vmul.f32 %v121, %v890
    %v1020 = vmul.f32 %v122, %v891
    %v1021 = vmul.f32 %v123, %v892
    %v1022 = vmul.f32 %v124, %v893
    %v1023 = vmul.f32 %v125, %v894
    %v1024 = vmul.f32 %v126, %v895
    %v1025 = vmul.f32 %v127, %v896
    %v1026 = vmul.f32 %v128, %v897
    %v1027 = vmul.f32 %v129, %v898
    %v1028 = vmul.f32 %v130, %v899
    %v1029 = vmul.f32 %v131, %v900
    %v1030 = vmul.f32 %v132, %v901
    %v1031 = vmul.f32 %v133, %v902
    %v1032 = vmul.f32 %v134, %v903
    %v1033 = vmul.f32 %v135, %v904
    %v1034 = vmul.f32 %v136, %v905
    %v1035 = vmul.f32 %v137, %v906
    %v1036 = vmul.f32 %v138, %v907
    %v1037 = vmul.f32 %v139, %v908
    %v1038 = vmul.f32 %v140, %v909
    %v1039 = vmul.f32 %v141, %v910
    %v1040 = vmul.f32 %v142, %v911
    %v1041 = vmul.f32 %v143, %v912
    %v1042 = vmul.f32 %v144, %v913
    %v1043 = vmul.f32 %v145, %v914
    %v1044 = vmul.f32 %v146, %v915
    %v1045 = vmul.f32 %v147, %v916
    %v1046 = vmul.f32 %v148, %v917
    %v1047 = vmul.f32 %v149, %v918
    %v1048 = vmul.f32 %v150, %v919
    %v1049 = vmul.f32 %v151, %v920
    %v1050 = vmul.f32 %v152, %v921
    %v1051 = vmul.f32 %v153, %v922
    %v1053 = vlaneseq
    %v1054 = vshrl.u32 %v1053, 7
    %v1055 = vsub.s32 0, %v1054
    %v1056 = vrot.slane %v923, %v1055
    %v1058 = vmul.f32 %v924, %v1056
    %v1059 = vmul.f32 %v925, %v1056
    %v1060 = vmul.f32 %v926, %v1056
    %v1061 = vmul.f32 %v927, %v1056
    %v1062 = vmul.f32 %v928, %v1056
    %v1063 = vmul.f32 %v929, %v1056
    %v1064 = vmul.f32 %v930, %v1056
    %v1065 = vmul.f32 %v931, %v1056
    %v1066 = vmul.f32 %v932, %v1056
    %v1067 = vmul.f32 %v933, %v1056
    %v1068 = vmul.f32 %v934, %v1056
    %v1069 = vmul.f32 %v935, %v1056
    %v1070 = vmul.f32 %v936, %v1056
    %v1071 = vmul.f32 %v937, %v1056
    %v1072 = vmul.f32 %v938, %v1056
    %v1073 = vmul.f32 %v939, %v1056
    %v1074 = vmul.f32 %v940, %v1056
    %v1075 = vmul.f32 %v941, %v1056
    %v1076 = vmul.f32 %v942, %v1056
    %v1077 = vmul.f32 %v943, %v1056
    %v1078 = vmul.f32 %v944, %v1056
    %v1079 = vmul.f32 %v945, %v1056
    %v1080 = vmul.f32 %v946, %v1056
    %v1081 = vmul.f32 %v947, %v1056
    %v1082 = vmul.f32 %v948, %v1056
    %v1083 = vmul.f32 %v949, %v1056
    %v1084 = vmul.f32 %v950, %v1056
    %v1085 = vmul.f32 %v951, %v1056
    %v1086 = vmul.f32 %v952, %v1056
    %v1087 = vmul.f32 %v953, %v1056
    %v1088 = vmul.f32 %v954, %v1056
    %v1089 = vmul.f32 %v955, %v1056
    %v1090 = vmul.f32 %v956, %v1056
    %v1091 = vmul.f32 %v957, %v1056
    %v1092 = vmul.f32 %v958, %v1056
    %v1093 = vmul.f32 %v959, %v1056
    %v1094 = vmul.f32 %v960, %v1056
    %v1095 = vmul.f32 %v961, %v1056
    %v1096 = vmul.f32 %v962, %v1056
    %v1097 = vmul.f32 %v963, %v1056
    %v1098 = vmul.f32 %v964, %v1056
    %v1099 = vmul.f32 %v965, %v1056
    %v1100 = vmul.f32 %v966, %v1056
    %v1101 = vmul.f32 %v967, %v1056
    %v1102 = vmul.f32 %v968, %v1056
    %v1103 = vmul.f32 %v969, %v1056
    %v1104 = vmul.f32 %v970, %v1056
    %v1105 = vmul.f32 %v971, %v1056
    %v1106 = vmul.f32 %v972, %v1056
    %v1107 = vmul.f32 %v973, %v1056
    %v1108 = vmul.f32 %v974, %v1056
    %v1109 = vmul.f32 %v975, %v1056
    %v1110 = vmul.f32 %v976, %v1056
    %v1111 = vmul.f32 %v977, %v1056
    %v1112 = vmul.f32 %v978, %v1056
    %v1113 = vmul.f32 %v979, %v1056
    %v1114 = vmul.f32 %v980, %v1056
    %v1115 = vmul.f32 %v981, %v1056
    %v1116 = vmul.f32 %v982, %v1056
    %v1117 = vmul.f32 %v983, %v1056
    %v1118 = vmul.f32 %v984, %v1056
    %v1119 = vmul.f32 %v985, %v1056
    %v1120 = vmul.f32 %v986, %v1056
    %v1121 = vmul.f32 %v987, %v1056
    %v1122 = vmul.f32 %v988, %v1056
    %v1123 = vmul.f32 %v989, %v1056
    %v1124 = vmul.f32 %v990, %v1056
    %v1125 = vmul.f32 %v991, %v1056
    %v1126 = vmul.f32 %v992, %v1056
    %v1127 = vmul.f32 %v993, %v1056
    %v1128 = vmul.f32 %v994, %v1056
    %v1129 = vmul.f32 %v995, %v1056
    %v1130 = vmul.f32 %v996, %v1056
    %v1131 = vmul.f32 %v997, %v1056
    %v1132 = vmul.f32 %v998, %v1056
    %v1133 = vmul.f32 %v999, %v1056
    %v1134 = vmul.f32 %v1000, %v1056
    %v1135 = vmul.f32 %v1001, %v1056
    %v1136 = vmul.f32 %v1002, %v1056
    %v1137 = vmul.f32 %v1003, %v1056
    %v1138 = vmul.f32 %v1004, %v1056
    %v1139 = vmul.f32 %v1005, %v1056
    %v1140 = vmul.f32 %v1006, %v1056
    %v1141 = vmul.f32 %v1007, %v1056
    %v1142 = vmul.f32 %v1008, %v1056
    %v1143 = vmul.f32 %v1009, %v1056
    %v1144 = vmul.f32 %v1010, %v1056
    %v1145 = vmul.f32 %v1011, %v1056
    %v1146 = vmul.f32 %v1012, %v1056
    %v1147 = vmul.f32 %v1013, %v1056
    %v1148 = vmul.f32 %v1014, %v1056
    %v1149 = vmul.f32 %v1015, %v1056
    %v1150 = vmul.f32 %v1016, %v1056
    %v1151 = vmul.f32 %v1017, %v1056
    %v1152 = vmul.f32 %v1018, %v1056
    %v1153 = vmul.f32 %v1019, %v1056
    %v1154 = vmul.f32 %v1020, %v1056
    %v1155 = vmul.f32 %v1021, %v1056
    %v1156 = vmul.f32 %v1022, %v1056
    %v1157 = vmul.f32 %v1023, %v1056
    %v1158 = vmul.f32 %v1024, %v1056
    %v1159 = vmul.f32 %v1025, %v1056
    %v1160 = vmul.f32 %v1026, %v1056
    %v1161 = vmul.f32 %v1027, %v1056
    %v1162 = vmul.f32 %v1028, %v1056
    %v1163 = vmul.f32 %v1029, %v1056
    %v1164 = vmul.f32 %v1030, %v1056
    %v1165 = vmul.f32 %v1031, %v1056
    %v1166 = vmul.f32 %v1032, %v1056
    %v1167 = vmul.f32 %v1033, %v1056
    %v1168 = vmul.f32 %v1034, %v1056
    %v1169 = vmul.f32 %v1035, %v1056
    %v1170 = vmul.f32 %v1036, %v1056
    %v1171 = vmul.f32 %v1037, %v1056
    %v1172 = vmul.f32 %v1038, %v1056
    %v1173 = vmul.f32 %v1039, %v1056
    %v1174 = vmul.f32 %v1040, %v1056
    %v1175 = vmul.f32 %v1041, %v1056
    %v1176 = vmul.f32 %v1042, %v1056
    %v1177 = vmul.f32 %v1043, %v1056
    %v1178 = vmul.f32 %v1044, %v1056
    %v1179 = vmul.f32 %v1045, %v1056
    %v1180 = vmul.f32 %v1046, %v1056
    %v1181 = vmul.f32 %v1047, %v1056
    %v1182 = vmul.f32 %v1048, %v1056
    %v1183 = vmul.f32 %v1049, %v1056
    %v1184 = vmul.f32 %v1050, %v1056
    %v1185 = vmul.f32 %v1051, %v1056
    %1186 = vst [vmem:[#allocation5] sm:$0xff] %v1058
    %1187 = vst [vmem:[#allocation5 + $0x8] sm:$0xff] %v1059
    %1188 = vst [vmem:[#allocation5 + $0x10] sm:$0xff] %v1060
    %1189 = vst [vmem:[#allocation5 + $0x18] sm:$0xff] %v1061
    %1190 = vst [vmem:[#allocation5 + $0x20] sm:$0xff] %v1062
    %1191 = vst [vmem:[#allocation5 + $0x28] sm:$0xff] %v1063
    %1192 = vst [vmem:[#allocation5 + $0x30] sm:$0xff] %v1064
    %1193 = vst [vmem:[#allocation5 + $0x38] sm:$0xff] %v1065
    %1194 = vst [vmem:[#allocation5 + $0x40] sm:$0xff] %v1066
    %1195 = vst [vmem:[#allocation5 + $0x48] sm:$0xff] %v1067
    %1196 = vst [vmem:[#allocation5 + $0x50] sm:$0xff] %v1068
    %1197 = vst [vmem:[#allocation5 + $0x58] sm:$0xff] %v1069
    %1198 = vst [vmem:[#allocation5 + $0x60] sm:$0xff] %v1070
    %1199 = vst [vmem:[#allocation5 + $0x68] sm:$0xff] %v1071
    %1200 = vst [vmem:[#allocation5 + $0x70] sm:$0xff] %v1072
    %1201 = vst [vmem:[#allocation5 + $0x78] sm:$0xff] %v1073
    %1202 = vst [vmem:[#allocation5 + $0x80] sm:$0xff] %v1074
    %1203 = vst [vmem:[#allocation5 + $0x88] sm:$0xff] %v1075
    %1204 = vst [vmem:[#allocation5 + $0x90] sm:$0xff] %v1076
    %1205 = vst [vmem:[#allocation5 + $0x98] sm:$0xff] %v1077
    %1206 = vst [vmem:[#allocation5 + $0xa0] sm:$0xff] %v1078
    %1207 = vst [vmem:[#allocation5 + $0xa8] sm:$0xff] %v1079
    %1208 = vst [vmem:[#allocation5 + $0xb0] sm:$0xff] %v1080
    %1209 = vst [vmem:[#allocation5 + $0xb8] sm:$0xff] %v1081
    %1210 = vst [vmem:[#allocation5 + $0xc0] sm:$0xff] %v1082
    %1211 = vst [vmem:[#allocation5 + $0xc8] sm:$0xff] %v1083
    %1212 = vst [vmem:[#allocation5 + $0xd0] sm:$0xff] %v1084
    %1213 = vst [vmem:[#allocation5 + $0xd8] sm:$0xff] %v1085
    %1214 = vst [vmem:[#allocation5 + $0xe0] sm:$0xff] %v1086
    %1215 = vst [vmem:[#allocation5 + $0xe8] sm:$0xff] %v1087
    %1216 = vst [vmem:[#allocation5 + $0xf0] sm:$0xff] %v1088
    %1217 = vst [vmem:[#allocation5 + $0xf8] sm:$0xff] %v1089
    %1218 = vst [vmem:[#allocation5 + $0x100] sm:$0xff] %v1090
    %1219 = vst [vmem:[#allocation5 + $0x108] sm:$0xff] %v1091
    %1220 = vst [vmem:[#allocation5 + $0x110] sm:$0xff] %v1092
    %1221 = vst [vmem:[#allocation5 + $0x118] sm:$0xff] %v1093
    %1222 = vst [vmem:[#allocation5 + $0x120] sm:$0xff] %v1094
    %1223 = vst [vmem:[#allocation5 + $0x128] sm:$0xff] %v1095
    %1224 = vst [vmem:[#allocation5 + $0x130] sm:$0xff] %v1096
    %1225 = vst [vmem:[#allocation5 + $0x138] sm:$0xff] %v1097
    %1226 = vst [vmem:[#allocation5 + $0x140] sm:$0xff] %v1098
    %1227 = vst [vmem:[#allocation5 + $0x148] sm:$0xff] %v1099
    %1228 = vst [vmem:[#allocation5 + $0x150] sm:$0xff] %v1100
    %1229 = vst [vmem:[#allocation5 + $0x158] sm:$0xff] %v1101
    %1230 = vst [vmem:[#allocation5 + $0x160] sm:$0xff] %v1102
    %1231 = vst [vmem:[#allocation5 + $0x168] sm:$0xff] %v1103
    %1232 = vst [vmem:[#allocation5 + $0x170] sm:$0xff] %v1104
    %1233 = vst [vmem:[#allocation5 + $0x178] sm:$0xff] %v1105
    %1234 = vst [vmem:[#allocation5 + $0x180] sm:$0xff] %v1106
    %1235 = vst [vmem:[#allocation5 + $0x188] sm:$0xff] %v1107
    %1236 = vst [vmem:[#allocation5 + $0x190] sm:$0xff] %v1108
    %1237 = vst [vmem:[#allocation5 + $0x198] sm:$0xff] %v1109
    %1238 = vst [vmem:[#allocation5 + $0x1a0] sm:$0xff] %v1110
    %1239 = vst [vmem:[#allocation5 + $0x1a8] sm:$0xff] %v1111
    %1240 = vst [vmem:[#allocation5 + $0x1b0] sm:$0xff] %v1112
    %1241 = vst [vmem:[#allocation5 + $0x1b8] sm:$0xff] %v1113
    %1242 = vst [vmem:[#allocation5 + $0x1c0] sm:$0xff] %v1114
    %1243 = vst [vmem:[#allocation5 + $0x1c8] sm:$0xff] %v1115
    %1244 = vst [vmem:[#allocation5 + $0x1d0] sm:$0xff] %v1116
    %1245 = vst [vmem:[#allocation5 + $0x1d8] sm:$0xff] %v1117
    %1246 = vst [vmem:[#allocation5 + $0x1e0] sm:$0xff] %v1118
    %1247 = vst [vmem:[#allocation5 + $0x1e8] sm:$0xff] %v1119
    %1248 = vst [vmem:[#allocation5 + $0x1f0] sm:$0xff] %v1120
    %1249 = vst [vmem:[#allocation5 + $0x1f8] sm:$0xff] %v1121
    %1250 = vst [vmem:[#allocation5 + $0x200] sm:$0xff] %v1122
    %1251 = vst [vmem:[#allocation5 + $0x208] sm:$0xff] %v1123
    %1252 = vst [vmem:[#allocation5 + $0x210] sm:$0xff] %v1124
    %1253 = vst [vmem:[#allocation5 + $0x218] sm:$0xff] %v1125
    %1254 = vst [vmem:[#allocation5 + $0x220] sm:$0xff] %v1126
    %1255 = vst [vmem:[#allocation5 + $0x228] sm:$0xff] %v1127
    %1256 = vst [vmem:[#allocation5 + $0x230] sm:$0xff] %v1128
    %1257 = vst [vmem:[#allocation5 + $0x238] sm:$0xff] %v1129
    %1258 = vst [vmem:[#allocation5 + $0x240] sm:$0xff] %v1130
    %1259 = vst [vmem:[#allocation5 + $0x248] sm:$0xff] %v1131
    %1260 = vst [vmem:[#allocation5 + $0x250] sm:$0xff] %v1132
    %1261 = vst [vmem:[#allocation5 + $0x258] sm:$0xff] %v1133
    %1262 = vst [vmem:[#allocation5 + $0x260] sm:$0xff] %v1134
    %1263 = vst [vmem:[#allocation5 + $0x268] sm:$0xff] %v1135
    %1264 = vst [vmem:[#allocation5 + $0x270] sm:$0xff] %v1136
    %1265 = vst [vmem:[#allocation5 + $0x278] sm:$0xff] %v1137
    %1266 = vst [vmem:[#allocation5 + $0x280] sm:$0xff] %v1138
    %1267 = vst [vmem:[#allocation5 + $0x288] sm:$0xff] %v1139
    %1268 = vst [vmem:[#allocation5 + $0x290] sm:$0xff] %v1140
    %1269 = vst [vmem:[#allocation5 + $0x298] sm:$0xff] %v1141
    %1270 = vst [vmem:[#allocation5 + $0x2a0] sm:$0xff] %v1142
    %1271 = vst [vmem:[#allocation5 + $0x2a8] sm:$0xff] %v1143
    %1272 = vst [vmem:[#allocation5 + $0x2b0] sm:$0xff] %v1144
    %1273 = vst [vmem:[#allocation5 + $0x2b8] sm:$0xff] %v1145
    %1274 = vst [vmem:[#allocation5 + $0x2c0] sm:$0xff] %v1146
    %1275 = vst [vmem:[#allocation5 + $0x2c8] sm:$0xff] %v1147
    %1276 = vst [vmem:[#allocation5 + $0x2d0] sm:$0xff] %v1148
    %1277 = vst [vmem:[#allocation5 + $0x2d8] sm:$0xff] %v1149
    %1278 = vst [vmem:[#allocation5 + $0x2e0] sm:$0xff] %v1150
    %1279 = vst [vmem:[#allocation5 + $0x2e8] sm:$0xff] %v1151
    %1280 = vst [vmem:[#allocation5 + $0x2f0] sm:$0xff] %v1152
    %1281 = vst [vmem:[#allocation5 + $0x2f8] sm:$0xff] %v1153
    %1282 = vst [vmem:[#allocation5 + $0x300] sm:$0xff] %v1154
    %1283 = vst [vmem:[#allocation5 + $0x308] sm:$0xff] %v1155
    %1284 = vst [vmem:[#allocation5 + $0x310] sm:$0xff] %v1156
    %1285 = vst [vmem:[#allocation5 + $0x318] sm:$0xff] %v1157
    %1286 = vst [vmem:[#allocation5 + $0x320] sm:$0xff] %v1158
    %1287 = vst [vmem:[#allocation5 + $0x328] sm:$0xff] %v1159
    %1288 = vst [vmem:[#allocation5 + $0x330] sm:$0xff] %v1160
    %1289 = vst [vmem:[#allocation5 + $0x338] sm:$0xff] %v1161
    %1290 = vst [vmem:[#allocation5 + $0x340] sm:$0xff] %v1162
    %1291 = vst [vmem:[#allocation5 + $0x348] sm:$0xff] %v1163
    %1292 = vst [vmem:[#allocation5 + $0x350] sm:$0xff] %v1164
    %1293 = vst [vmem:[#allocation5 + $0x358] sm:$0xff] %v1165
    %1294 = vst [vmem:[#allocation5 + $0x360] sm:$0xff] %v1166
    %1295 = vst [vmem:[#allocation5 + $0x368] sm:$0xff] %v1167
    %1296 = vst [vmem:[#allocation5 + $0x370] sm:$0xff] %v1168
    %1297 = vst [vmem:[#allocation5 + $0x378] sm:$0xff] %v1169
    %1298 = vst [vmem:[#allocation5 + $0x380] sm:$0xff] %v1170
    %1299 = vst [vmem:[#allocation5 + $0x388] sm:$0xff] %v1171
    %1300 = vst [vmem:[#allocation5 + $0x390] sm:$0xff] %v1172
    %1301 = vst [vmem:[#allocation5 + $0x398] sm:$0xff] %v1173
    %1302 = vst [vmem:[#allocation5 + $0x3a0] sm:$0xff] %v1174
    %1303 = vst [vmem:[#allocation5 + $0x3a8] sm:$0xff] %v1175
    %1304 = vst [vmem:[#allocation5 + $0x3b0] sm:$0xff] %v1176
    %1305 = vst [vmem:[#allocation5 + $0x3b8] sm:$0xff] %v1177
    %1306 = vst [vmem:[#allocation5 + $0x3c0] sm:$0xff] %v1178
    %1307 = vst [vmem:[#allocation5 + $0x3c8] sm:$0xff] %v1179
    %1308 = vst [vmem:[#allocation5 + $0x3d0] sm:$0xff] %v1180
    %1309 = vst [vmem:[#allocation5 + $0x3d8] sm:$0xff] %v1181
    %1310 = vst [vmem:[#allocation5 + $0x3e0] sm:$0xff] %v1182
    %1311 = vst [vmem:[#allocation5 + $0x3e8] sm:$0xff] %v1183
    %1312 = vst [vmem:[#allocation5 + $0x3f0] sm:$0xff] %v1184
    %1313 = vst [vmem:[#allocation5 + $0x3f8] sm:$0xff] %v1185
    // Predicated region
    $region14: #{rms_norm.1} parent=1 // pred_check
      _
    $region15: #{rms_norm.1} parent=1 // pred_check_branch
      %1315 = sbr.rel (0) target = $region17
    $region16: #{rms_norm.1} parent=1 // pred_region
      %s1317 = ssub.s32 16384, 16384
      %1318 = vsyncadd [#allocation4], %s1317
      %s1319 = sshll.u32 [#allocation5], 4
      %s1320 = int_to_ptr.vmem [resolvable:$true] %s1319
      %1325 = dma.vmem_to_hbm [thread:$0]  %s1320, 16384, %s2, [#allocation4], 128, 128, 8
    $region17: #{rms_norm.1} parent=1 // pred_fallthru
      _
    // Predicated region
    $region18: #{rms_norm.1} parent=1 // pred_check
      _
    $region19: #{rms_norm.1} parent=1 // pred_check_branch
      %1327 = sbr.rel (0) target = $region21
    $region20: #{rms_norm.1} parent=1 // pred_region
      %1328 = dma.done [#allocation4], 16384
    $region21: #{rms_norm.1} parent=1 // pred_fallthru
      _
    %1329 = vsyncpa [#allocation3], 1
    %1330 = vsyncpa [#allocation4], 1

</llo_original>
